<compile_context>
chip_gen: v7x
topology: tpu7x:2x2x1
jax: 0.10.0
libtpu: 0.0.40
codegen_flags: <defaults>
</compile_context>

<pallas_src>
import jax
import jax.numpy as jnp
from jax.experimental import pallas as pl
from jax.experimental.pallas import tpu as pltpu


# VMEM sizing: budget used to pick the length tile (kept well under the scoped
# limit we request, which itself stays under v7x's 64 MiB physical VMEM; v5e/v6e
# have 128 MiB so this is safe everywhere).
_TILE_VMEM_BUDGET = 24 * 1024 * 1024
_VMEM_LIMIT_BYTES = 48 * 1024 * 1024


def _round_up(x, m):
    return -(-x // m) * m


# ---------------------------------------------------------------------------
# Kernel
# ---------------------------------------------------------------------------

def _fused_conv3_kernel(x_ref, corr_ref, w_ref, b_ref, out_ref):
    # x_ref:    (1, C_in, TL)    io_dtype — current length tile (TL % 128 == 0)
    # corr_ref: (1, 1, C_out, 2) f32      — boundary corrections for lanes 0 / TL-1
    # w_ref:    (3, C_out, C_in) f32      — folded per-tap weights
    # b_ref:    (C_out, 1)       f32      — folded bias
    # out_ref:  (1, C_out, TL)   io_dtype
    x = x_ref[0].astype(jnp.float32)                    # (C_in, TL)
    tl = x.shape[1]

    # Shifted views via XLU rolls (wrap-around). The two wrapped boundary lanes
    # are patched after the matmuls with tiny single-column fixes instead of
    # full-tile iota/where selects (saves ~3 full-tile temporaries per step).
    x_m1 = pltpu.roll(x, shift=1, axis=1)               # col j holds x[:, j-1]
    x_p1 = pltpu.roll(x, shift=tl - 1, axis=1)          # col j holds x[:, j+1]

    acc = jnp.dot(w_ref[0], x_m1, preferred_element_type=jnp.float32)
    acc = acc + jnp.dot(w_ref[1], x, preferred_element_type=jnp.float32)
    acc = acc + jnp.dot(w_ref[2], x_p1, preferred_element_type=jnp.float32)
    acc = acc + b_ref[...]
    out_ref[0] = acc.astype(out_ref.dtype)

    # Boundary patch: replace the wrapped-around tap contribution with the true
    # neighbour column (zero at the sequence edge) on lanes 0 and TL-1 only.
    corr = corr_ref[0, 0]                                # (C_out, 2), f32
    out_ref[0, :, 0:1] = (acc[:, 0:1] + corr[:, 0:1]).astype(out_ref.dtype)
    out_ref[0, :, tl - 1:tl] = (acc[:, tl - 1:tl] + corr[:, 1:2]).astype(out_ref.dtype)


# ---------------------------------------------------------------------------
# Wrapper
# ---------------------------------------------------------------------------

def _choose_tiling(n, c_in, c_out, length, io_bytes, max_tile_l=None):
    """Pick (tile_length, num_tiles): 128-aligned tile sized from the VMEM budget."""
    # Bytes held in VMEM per length-column:
    #   streamed x/out blocks (double-buffered): 2 * (c_in + c_out) * io_bytes
    #   in-kernel f32 temporaries (x cast, two rolled copies, acc + dot temp):
    #   (3*c_in + 2*c_out) * 4
    per_col = 2 * (c_in + c_out) * io_bytes + (3 * c_in + 2 * c_out) * 4
    tl_cap = max(128, (_TILE_VMEM_BUDGET // per_col) // 128 * 128)
    if max_tile_l is not None:
        tl_cap = max(128, min(tl_cap, (max_tile_l // 128) * 128))
    n_l = max(1, -(-length // tl_cap))
    if n == 1 and n_l == 1 and length > 128:
        n_l = 2  # keep both v7x TensorCores busy even for a single sample
    tl = _round_up(-(-length // n_l), 128)
    n_l = -(-length // tl)
    return tl, n_l


def whole_conv1d_arch(x, params, *, io_dtype=jnp.bfloat16, max_tile_l=None):
    """Fused forward pass of WholeConv1dArch.

    The module is (Conv1d k=3 pad=1 || Conv1d k=3 pad=1) -> channel concat ->
    Conv1d k=1, i.e. purely linear, so it is algebraically folded into one
    effective 3-tap conv (valid only while no nonlinearity sits between the
    branch convs and the head):
        W_eff[t] = w3[:, :C1] @ w1[:, :, t] + w3[:, C1:] @ w2[:, :, t]
        b_eff    = w3[:, :C1] @ b1 + w3[:, C1:] @ b2 + b3

    io_dtype: dtype of the streamed x / output (default bf16 halves HBM traffic;
      the fold, the weights and all accumulation stay float32).
    max_tile_l: optional cap on the length tile (mainly for testing).
    """
    N, C_in, L = x.shape
    w1, b1 = params["w1"], params["b1"]          # (C1, C_in, 3), (C1,)
    w2, b2 = params["w2"], params["b2"]          # (C2, C_in, 3), (C2,)
    w3, b3 = params["w3"], params["b3"]          # (C_out, C1+C2, 1), (C_out,)
    # Shape guards for the linear fold's validity.
    assert w1.shape[2] == 3 and w2.shape[2] == 3 and w3.shape[2] == 1
    C1 = w1.shape[0]
    C_out = w3.shape[0]

    f32 = jnp.float32
    w3a = w3[:, :C1, 0].astype(f32)              # (C_out, C1)
    w3b = w3[:, C1:, 0].astype(f32)              # (C_out, C2)
    w_eff = (jnp.einsum("oc,cit->toi", w3a, w1.astype(f32))
             + jnp.einsum("oc,cit->toi", w3b, w2.astype(f32)))        # (3, C_out, C_in)
    b_eff = (w3a @ b1.astype(f32) + w3b @ b2.astype(f32)
             + b3.astype(f32))[:, None]                               # (C_out, 1)

    io_dtype = jnp.dtype(io_dtype)
    io_bytes = io_dtype.itemsize
    tl, n_l = _choose_tiling(N, C_in, C_out, L, io_bytes, max_tile_l)
    L_pad = tl * n_l

    xs = x.astype(io_dtype)
    if L_pad != L:
        # Pad the length up to a whole number of 128-aligned tiles; the padded
        # output columns are sliced off below. Zero padding keeps the conv's
        # zero boundary condition for the last real column.
        xs = jnp.pad(xs, ((0, 0), (0, 0), (0, L_pad - L)))

    # Per-tile boundary corrections (computed once in f32 in the wrapper):
    #   corr[..., 0] = W0 @ (left_neighbour_col  - wrapped_col)   for lane 0
    #   corr[..., 1] = W2 @ (right_neighbour_col - wrapped_col)   for lane TL-1
    # where the neighbour column is zero at the sequence edge. This replaces the
    # previous full-tile iota/where masks. (The per-step corr block is only a few
    # bytes; with the enlarged tiles the grid has very few steps so its DMA
    # descriptor cost is negligible.)
    xt = xs.reshape(N, C_in, n_l, tl)
    zero_col = jnp.zeros((N, C_in, 1), io_dtype)
    left = jnp.concatenate([zero_col, xt[:, :, :-1, tl - 1]], axis=2)   # (N, C_in, n_l)
    right = jnp.concatenate([xt[:, :, 1:, 0], zero_col], axis=2)        # (N, C_in, n_l)
    wrap_left = xt[:, :, :, tl - 1]                                     # rolls into lane 0
    wrap_right = xt[:, :, :, 0]                                         # rolls into lane TL-1
    diff_l = left.astype(f32) - wrap_left.astype(f32)
    diff_r = right.astype(f32) - wrap_right.astype(f32)
    corr_l = jnp.einsum("oi,nil->nlo", w_eff[0], diff_l)                # (N, n_l, C_out)
    corr_r = jnp.einsum("oi,nil->nlo", w_eff[2], diff_r)
    corr = jnp.stack([corr_l, corr_r], axis=-1)                         # (N, n_l, C_out, 2)

    # NOTE: if N is ever large while n_l is small (very short sequences), a further
    # lever is processing several batch samples per grid step; not needed here.
    out = pl.pallas_call(
        _fused_conv3_kernel,
        out_shape=jax.ShapeDtypeStruct((N, C_out, L_pad), io_dtype),
        grid=(N, n_l),
        in_specs=[
            pl.BlockSpec((1, C_in, tl), lambda n, l: (n, 0, l)),
            pl.BlockSpec((1, 1, C_out, 2), lambda n, l: (n, l, 0, 0)),
            pl.BlockSpec((3, C_out, C_in), lambda n, l: (0, 0, 0)),
            pl.BlockSpec((C_out, 1), lambda n, l: (0, 0)),
        ],
        out_specs=pl.BlockSpec((1, C_out, tl), lambda n, l: (n, 0, l)),
        compiler_params=pltpu.CompilerParams(
            dimension_semantics=("parallel", "parallel"),
            vmem_limit_bytes=_VMEM_LIMIT_BYTES),
        cost_estimate=pl.CostEstimate(
            flops=2 * 3 * C_out * C_in * N * L_pad,
            transcendentals=0,
            bytes_accessed=(C_in + C_out) * N * L_pad * io_bytes),
    )(xs, corr, w_eff, b_eff)

    if L_pad != L:
        out = out[:, :, :L]
    return out


# ---------------------------------------------------------------------------
# Pure-JAX reference (unfused, exactly mirrors the PyTorch module)
# ---------------------------------------------------------------------------

def _conv1d_ref(x, w, b, padding):
    out = jax.lax.conv_general_dilated(
        x, w, window_strides=(1,), padding=[(padding, padding)],
        dimension_numbers=("NCH", "OIH", "NCH"))
    return out + b[None, :, None]


def whole_conv1d_arch_ref(x, params):
    out1 = _conv1d_ref(x, params["w1"], params["b1"], padding=1)
    out2 = _conv1d_ref(x, params["w2"], params["b2"], padding=1)
    out = jnp.concatenate((out1, out2), axis=1)
    return _conv1d_ref(out, params["w3"], params["b3"], padding=0)


# ---------------------------------------------------------------------------
# Self-test
# ---------------------------------------------------------------------------

if __name__ == "__main__":
    C_in, C1, C2, C_out = 4, 8, 8, 6

    key = jax.random.PRNGKey(0)
    ks = jax.random.split(key, 7)
    params = {
        "w1": jax.random.normal(ks[0], (C1, C_in, 3), jnp.float32) * 0.1,
        "b1": jax.random.normal(ks[1], (C1,), jnp.float32) * 0.1,
        "w2": jax.random.normal(ks[2], (C2, C_in, 3), jnp.float32) * 0.1,
        "b2": jax.random.normal(ks[3], (C2,), jnp.float32) * 0.1,
        "w3": jax.random.normal(ks[4], (C_out, C1 + C2, 1), jnp.float32) * 0.1,
        "b3": jax.random.normal(ks[5], (C_out,), jnp.float32) * 0.1,
    }

    # 1) Toy spec shape (batch=2, channels=4, length=16): exercises the
    #    pad-to-128-aligned-tile path. f32 I/O -> tight check.
    x = jax.random.normal(ks[6], (2, C_in, 16), jnp.float32)
    out = jax.block_until_ready(whole_conv1d_arch(x, params, io_dtype=jnp.float32))
    ref = jax.block_until_ready(whole_conv1d_arch_ref(x, params))
    assert out.shape == ref.shape == (2, C_out, 16)
    assert jnp.allclose(out, ref, rtol=1e-4, atol=1e-5), "f32 padded-L mismatch"

    # 2) Multi-tile path (forced 128-wide tiles -> 2 tiles per sample): exercises
    #    the wrap-around rolls and the 2-lane boundary correction across a tile
    #    edge. f32 I/O -> tight check.
    x2 = jax.random.normal(jax.random.PRNGKey(1), (2, C_in, 256), jnp.float32)
    out2 = jax.block_until_ready(
        whole_conv1d_arch(x2, params, io_dtype=jnp.float32, max_tile_l=128))
    ref2 = jax.block_until_ready(whole_conv1d_arch_ref(x2, params))
    assert out2.shape == (2, C_out, 256)
    assert jnp.allclose(out2, ref2, rtol=1e-4, atol=1e-5), "f32 tiled mismatch"

    # 3) Default path: bf16 streamed I/O, auto tile sizing, and the N == 1 split
    #    into >= 2 tiles (keeps both v7x TensorCores busy).
    x3 = jax.random.normal(jax.random.PRNGKey(2), (1, C_in, 256), jnp.float32)
    out3 = jax.block_until_ready(whole_conv1d_arch(x3, params))
    ref3 = jax.block_until_ready(whole_conv1d_arch_ref(x3, params))
    assert out3.shape == (1, C_out, 256) and out3.dtype == jnp.bfloat16
    assert jnp.allclose(out3.astype(jnp.float32), ref3, rtol=5e-2, atol=5e-2), \
        "bf16 default-path mismatch"

    print("KERNEL_OK")
</pallas_src>

<mosaic_0001>
module attributes {stable_mosaic.version = 11 : i64} {
  func.func @_fused_conv3_kernel(%arg0: i32, %arg1: i32, %arg2: memref<1x4x128xf32, #tpu.memory_space<vmem>>, %arg3: memref<1x1x6x2xf32, #tpu.memory_space<vmem>>, %arg4: memref<3x6x4xf32, #tpu.memory_space<vmem>>, %arg5: memref<6x1xf32, #tpu.memory_space<vmem>>, %arg6: memref<1x6x128xf32, #tpu.memory_space<vmem>>) attributes {dimension_semantics = [#tpu.dimension_semantics<parallel>, #tpu.dimension_semantics<parallel>], iteration_bounds = array<i64: 2, 1>, scalar_prefetch = 0 : i64, scratch_operands = 0 : i64, tpu.core_type = #tpu.core_type<tc>, window_params = [{transform_indices = @transform_0, window_bounds = array<i64: 1, 4, 128>}, {transform_indices = @transform_1, window_bounds = array<i64: 1, 1, 6, 2>}, {pipeline_mode = #tpu.pipeline_mode<synchronous>, transform_indices = @transform_2, window_bounds = array<i64: 3, 6, 4>}, {pipeline_mode = #tpu.pipeline_mode<synchronous>, transform_indices = @transform_3, window_bounds = array<i64: 6, 1>}, {transform_indices = @transform_4, window_bounds = array<i64: 1, 6, 128>}]} {
    %c0 = arith.constant 0 : index
    %c0_0 = arith.constant 0 : index
    %c0_1 = arith.constant 0 : index
    %0 = vector.load %arg2[%c0, %c0_0, %c0_1] : memref<1x4x128xf32, #tpu.memory_space<vmem>>, vector<1x4x128xf32>
    %1 = vector.shape_cast %0 : vector<1x4x128xf32> to vector<4x128xf32>
    %c1_i32 = arith.constant 1 : i32
    %2 = tpu.dynamic_rotate %1 by %c1_i32 dim 1 : vector<4x128xf32>, i32 -> vector<4x128xf32>
    %c127_i32 = arith.constant 127 : i32
    %3 = tpu.dynamic_rotate %1 by %c127_i32 dim 1 : vector<4x128xf32>, i32 -> vector<4x128xf32>
    %c0_2 = arith.constant 0 : index
    %c0_3 = arith.constant 0 : index
    %c0_4 = arith.constant 0 : index
    %4 = vector.load %arg4[%c0_2, %c0_3, %c0_4] : memref<3x6x4xf32, #tpu.memory_space<vmem>>, vector<1x6x4xf32>
    %5 = vector.shape_cast %4 : vector<1x6x4xf32> to vector<6x4xf32>
    %cst = arith.constant dense<0.000000e+00> : vector<6x128xf32>
    %6 = tpu.matmul %5, %2, %cst {dimension_numbers = #tpu.dot_dimension_numbers<[1], [0], [0], [1], [0, 0, 1, 1], [], []>} : vector<6x4xf32>, vector<4x128xf32>, vector<6x128xf32> -> vector<6x128xf32>
    %c1 = arith.constant 1 : index
    %c0_5 = arith.constant 0 : index
    %c0_6 = arith.constant 0 : index
    %7 = vector.load %arg4[%c1, %c0_5, %c0_6] : memref<3x6x4xf32, #tpu.memory_space<vmem>>, vector<1x6x4xf32>
    %8 = vector.shape_cast %7 : vector<1x6x4xf32> to vector<6x4xf32>
    %cst_7 = arith.constant dense<0.000000e+00> : vector<6x128xf32>
    %9 = tpu.matmul %8, %1, %cst_7 {dimension_numbers = #tpu.dot_dimension_numbers<[1], [0], [0], [1], [0, 0, 1, 1], [], []>} : vector<6x4xf32>, vector<4x128xf32>, vector<6x128xf32> -> vector<6x128xf32>
    %10 = arith.addf %6, %9 : vector<6x128xf32>
    %c2 = arith.constant 2 : index
    %c0_8 = arith.constant 0 : index
    %c0_9 = arith.constant 0 : index
    %11 = vector.load %arg4[%c2, %c0_8, %c0_9] : memref<3x6x4xf32, #tpu.memory_space<vmem>>, vector<1x6x4xf32>
    %12 = vector.shape_cast %11 : vector<1x6x4xf32> to vector<6x4xf32>
    %cst_10 = arith.constant dense<0.000000e+00> : vector<6x128xf32>
    %13 = tpu.matmul %12, %3, %cst_10 {dimension_numbers = #tpu.dot_dimension_numbers<[1], [0], [0], [1], [0, 0, 1, 1], [], []>} : vector<6x4xf32>, vector<4x128xf32>, vector<6x128xf32> -> vector<6x128xf32>
    %14 = arith.addf %10, %13 : vector<6x128xf32>
    %c0_11 = arith.constant 0 : index
    %c0_12 = arith.constant 0 : index
    %15 = vector.load %arg5[%c0_11, %c0_12] : memref<6x1xf32, #tpu.memory_space<vmem>>, vector<6x1xf32>
    %16 = vector.broadcast %15 : vector<6x1xf32> to vector<6x128xf32>
    %17 = arith.addf %14, %16 : vector<6x128xf32>
    %c0_13 = arith.constant 0 : index
    %c0_14 = arith.constant 0 : index
    %c0_15 = arith.constant 0 : index
    %18 = vector.load %arg6[%c0_13, %c0_14, %c0_15] : memref<1x6x128xf32, #tpu.memory_space<vmem>>, vector<1x6x128xf32>
    %19 = vector.shape_cast %18 : vector<1x6x128xf32> to vector<6x128xf32>
    %20 = vector.shape_cast %17 : vector<6x128xf32> to vector<1x6x128xf32>
    tpu.vector_store %arg6[%c0_13, %c0_14, %c0_15], %20 {strides = array<i32>} : memref<1x6x128xf32, #tpu.memory_space<vmem>>, vector<1x6x128xf32>,
    %c0_16 = arith.constant 0 : index
    %c0_17 = arith.constant 0 : index
    %c0_18 = arith.constant 0 : index
    %c0_19 = arith.constant 0 : index
    %21 = vector.load %arg3[%c0_16, %c0_17, %c0_18, %c0_19] : memref<1x1x6x2xf32, #tpu.memory_space<vmem>>, vector<1x1x6x2xf32>
    %22 = vector.shape_cast %21 : vector<1x1x6x2xf32> to vector<6x2xf32>
    %23 = vector.extract_strided_slice %17 {offsets = [0, 0], sizes = [6, 1], strides = [1, 1]} : vector<6x128xf32> to vector<6x1xf32>
    %24 = vector.extract_strided_slice %22 {offsets = [0, 0], sizes = [6, 1], strides = [1, 1]} : vector<6x2xf32> to vector<6x1xf32>
    %25 = arith.addf %23, %24 : vector<6x1xf32>
    %c0_20 = arith.constant 0 : index
    %c0_21 = arith.constant 0 : index
    %c0_22 = arith.constant 0 : index
    %26 = vector.load %arg6[%c0_20, %c0_21, %c0_22] : memref<1x6x128xf32, #tpu.memory_space<vmem>>, vector<1x6x1xf32>
    %27 = vector.shape_cast %26 : vector<1x6x1xf32> to vector<6x1xf32>
    %28 = vector.shape_cast %25 : vector<6x1xf32> to vector<1x6x1xf32>
    tpu.vector_store %arg6[%c0_20, %c0_21, %c0_22], %28 {strides = array<i32>} : memref<1x6x128xf32, #tpu.memory_space<vmem>>, vector<1x6x1xf32>,
    %29 = vector.extract_strided_slice %17 {offsets = [0, 127], sizes = [6, 1], strides = [1, 1]} : vector<6x128xf32> to vector<6x1xf32>
    %30 = vector.extract_strided_slice %22 {offsets = [0, 1], sizes = [6, 1], strides = [1, 1]} : vector<6x2xf32> to vector<6x1xf32>
    %31 = arith.addf %29, %30 : vector<6x1xf32>
    %c0_23 = arith.constant 0 : index
    %c0_24 = arith.constant 0 : index
    %c127 = arith.constant 127 : index
    %32 = vector.load %arg6[%c0_23, %c0_24, %c127] : memref<1x6x128xf32, #tpu.memory_space<vmem>>, vector<1x6x1xf32>
    %33 = vector.shape_cast %32 : vector<1x6x1xf32> to vector<6x1xf32>
    %34 = vector.shape_cast %31 : vector<6x1xf32> to vector<1x6x1xf32>
    tpu.vector_store %arg6[%c0_23, %c0_24, %c127], %34 {strides = array<i32>} : memref<1x6x128xf32, #tpu.memory_space<vmem>>, vector<1x6x1xf32>,
    return
  }
  func.func @transform_0(%arg0: i32, %arg1: i32) -> (i32, i32, i32) {
    %c0_i32 = arith.constant 0 : i32
    %c0_i32_0 = arith.constant 0 : i32
    return %arg0, %c0_i32, %arg1 : i32, i32, i32
  }
  func.func @transform_1(%arg0: i32, %arg1: i32) -> (i32, i32, i32, i32) {
    %c0_i32 = arith.constant 0 : i32
    %c0_i32_0 = arith.constant 0 : i32
    %c0_i32_1 = arith.constant 0 : i32
    return %arg0, %arg1, %c0_i32, %c0_i32_0 : i32, i32, i32, i32
  }
  func.func @transform_2(%arg0: i32, %arg1: i32) -> (i32, i32, i32) {
    %c0_i32 = arith.constant 0 : i32
    %c0_i32_0 = arith.constant 0 : i32
    %c0_i32_1 = arith.constant 0 : i32
    %c0_i32_2 = arith.constant 0 : i32
    return %c0_i32, %c0_i32_0, %c0_i32_1 : i32, i32, i32
  }
  func.func @transform_3(%arg0: i32, %arg1: i32) -> (i32, i32) {
    %c0_i32 = arith.constant 0 : i32
    %c0_i32_0 = arith.constant 0 : i32
    %c0_i32_1 = arith.constant 0 : i32
    return %c0_i32, %c0_i32_0 : i32, i32
  }
  func.func @transform_4(%arg0: i32, %arg1: i32) -> (i32, i32, i32) {
    %c0_i32 = arith.constant 0 : i32
    %c0_i32_0 = arith.constant 0 : i32
    return %arg0, %c0_i32, %arg1 : i32, i32, i32
  }
}

</mosaic_0001>

<llo_original>
// kernel: tpu_custom_call.1
$region0: #{tpu_custom_call.1}
  #allocation0 [shape = 'u32[]', space=smem, size = 0x4, offset = 0x4, fixed_abs, tag = 'smem constant byte address 0x4 - core index']
  #allocation1 [shape = 'u32[144,128]{1,0:T(1,128)}', space=vmem, size = 0x12000, scoped, tag = 'internal scratch']
  %s0 = inlined_call_operand.vmem [shape: f32[2,4,128], index: 0, kind: input, shape index: {}]
  %s1 = inlined_call_operand.vmem [shape: f32[2,1,6,2], index: 1, kind: input, shape index: {}]
  %s2 = inlined_call_operand.vmem [shape: f32[3,6,4], index: 2, kind: input, shape index: {}]
  %s3 = inlined_call_operand.vmem [shape: f32[6,1], index: 3, kind: input, shape index: {}]
  %s4 = inlined_call_operand.vmem [shape: f32[2,6,128], index: 4, kind: output, shape index: {}]
  %s5 = sld [smem:[#allocation0]]
  $region49: #{tpu_custom_call.1} parent=0
    _
  %s7 = ssub.s32 1, %s5
  %s8 = scalar_select 0, %s7, %s5
  loop: start=0, step=1, limit=4
  $region2: #{tpu_custom_call.1} parent=0 // loop_pre_header
    _
  $region3: #{tpu_custom_call.1} parent=0 // loop_header
    %s10 = sphi 0, %s14
    %p11 = scmp.ge.s32.totalorder %s10, 4
    %s17 = sphi 0, %s29
    %s18 = sphi 0, %s25
    %s19 = sphi 0, %s17
    %s20 = sphi 0, %s18
    %s21 = sphi 0, %s19
    %s22 = sphi 0, %s20
    %s34 = sphi 0, %s36
    %s37 = sphi 0, %s34
    %s38 = sphi 0, %s37
    %s54 = sphi 0, %s38
    %s62 = sphi 0, %s64
    %s65 = sphi 0, %s62
    %s66 = sphi 0, %s65
    %s82 = sphi 0, %s66
    %s86 = sphi 0, %s86
    %s88 = sphi 0, %s86
    %s89 = sphi 0, %s88
    %s103 = sphi 0, %s89
    %s107 = sphi 0, %s107
    %s109 = sphi 0, %s107
    %s110 = sphi 0, %s109
    %s124 = sphi 0, %s110
    %s132 = sphi 0, %s134
    %s135 = sphi 0, %s132
    %s136 = sphi 0, %s135
    %s152 = sphi 0, %s136
  $region4: #{tpu_custom_call.1} parent=0 // loop_header_branch
    %13 = sbr.rel (%p11) target = $region8
  $region5: #{tpu_custom_call.1} parent=0 // loop_body
    %s15 = ssub.s32 %s10, 1
    %s16 = ssub.s32 %s10, 2
    %s23 = sadd.s32 1, %s18
    %p24 = scmp.ge.s32.totalorder %s23, 1
    %s25 = scalar_select %p24, 0, %s23
    %s26 = sadd.s32 1, %s17
    %s27 = scalar_select %p24, %s26, %s17
    %p28 = scmp.ge.s32.totalorder %s27, 2
    %s29 = scalar_select %p28, 0, %s27
    %s30 = ssub.s32 %s17, %s29
    %s31 = ssub.s32 %s18, %s25
    %s32 = sor.u32 %s30, %s31
    %p33 = scmp.eq.s32.totalorder %s32, 0
    %s35 = sadd.s32 %s34, 1
    %s36 = scalar_select %p33, %s34, %s35
    %p39 = pneg %p33
    %p40 = scmp.eq.s32.totalorder %s10, 1
    %p41 = por %p39, %p40
    %p42 = scmp.ne.s32.totalorder %s34, %s37
    %p43 = scmp.eq.s32.totalorder %s10, 0
    %p44 = por %p42, %p43
    %p45 = scmp.ne.s32.totalorder %s34, %s37
    %p46 = scmp.eq.s32.totalorder %s15, 1
    %p47 = por %p45, %p46
    %p48 = scmp.ne.s32.totalorder %s37, %s38
    %p49 = scmp.eq.s32.totalorder %s15, 0
    %p50 = por %p48, %p49
    %p51 = scmp.ne.s32.totalorder %s37, %s38
    %p52 = scmp.eq.s32.totalorder %s16, 1
    %p53 = por %p51, %p52
    %p55 = scmp.ne.s32.totalorder %s38, %s54
    %p56 = scmp.eq.s32.totalorder %s16, 0
    %p57 = por %p55, %p56
    %s58 = ssub.s32 %s17, %s29
    %s59 = ssub.s32 %s18, %s25
    %s60 = sor.u32 %s58, %s59
    %p61 = scmp.eq.s32.totalorder %s60, 0
    %s63 = sadd.s32 %s62, 1
    %s64 = scalar_select %p61, %s62, %s63
    %p67 = pneg %p61
    %p68 = scmp.eq.s32.totalorder %s10, 1
    %p69 = por %p67, %p68
    %p70 = scmp.ne.s32.totalorder %s62, %s65
    %p71 = scmp.eq.s32.totalorder %s10, 0
    %p72 = por %p70, %p71
    %p73 = scmp.ne.s32.totalorder %s62, %s65
    %p74 = scmp.eq.s32.totalorder %s15, 1
    %p75 = por %p73, %p74
    %p76 = scmp.ne.s32.totalorder %s65, %s66
    %p77 = scmp.eq.s32.totalorder %s15, 0
    %p78 = por %p76, %p77
    %p79 = scmp.ne.s32.totalorder %s65, %s66
    %p80 = scmp.eq.s32.totalorder %s16, 1
    %p81 = por %p79, %p80
    %p83 = scmp.ne.s32.totalorder %s66, %s82
    %p84 = scmp.eq.s32.totalorder %s16, 0
    %p85 = por %p83, %p84
    %s87 = sadd.s32 %s86, 1
    %p90 = scmp.eq.s32.totalorder %s10, 1
    %p91 = scmp.ne.s32.totalorder %s86, %s88
    %p92 = scmp.eq.s32.totalorder %s10, 0
    %p93 = por %p91, %p92
    %p94 = scmp.ne.s32.totalorder %s86, %s88
    %p95 = scmp.eq.s32.totalorder %s15, 1
    %p96 = por %p94, %p95
    %p97 = scmp.ne.s32.totalorder %s88, %s89
    %p98 = scmp.eq.s32.totalorder %s15, 0
    %p99 = por %p97, %p98
    %p100 = scmp.ne.s32.totalorder %s88, %s89
    %p101 = scmp.eq.s32.totalorder %s16, 1
    %p102 = por %p100, %p101
    %p104 = scmp.ne.s32.totalorder %s89, %s103
    %p105 = scmp.eq.s32.totalorder %s16, 0
    %p106 = por %p104, %p105
    %s108 = sadd.s32 %s107, 1
    %p111 = scmp.eq.s32.totalorder %s10, 1
    %p112 = scmp.ne.s32.totalorder %s107, %s109
    %p113 = scmp.eq.s32.totalorder %s10, 0
    %p114 = por %p112, %p113
    %p115 = scmp.ne.s32.totalorder %s107, %s109
    %p116 = scmp.eq.s32.totalorder %s15, 1
    %p117 = por %p115, %p116
    %p118 = scmp.ne.s32.totalorder %s109, %s110
    %p119 = scmp.eq.s32.totalorder %s15, 0
    %p120 = por %p118, %p119
    %p121 = scmp.ne.s32.totalorder %s109, %s110
    %p122 = scmp.eq.s32.totalorder %s16, 1
    %p123 = por %p121, %p122
    %p125 = scmp.ne.s32.totalorder %s110, %s124
    %p126 = scmp.eq.s32.totalorder %s16, 0
    %p127 = por %p125, %p126
    %s128 = ssub.s32 %s17, %s29
    %s129 = ssub.s32 %s18, %s25
    %s130 = sor.u32 %s128, %s129
    %p131 = scmp.eq.s32.totalorder %s130, 0
    %s133 = sadd.s32 %s132, 1
    %s134 = scalar_select %p131, %s132, %s133
    %p137 = pneg %p131
    %p138 = scmp.eq.s32.totalorder %s10, 1
    %p139 = por %p137, %p138
    %p140 = scmp.ne.s32.totalorder %s132, %s135
    %p141 = scmp.eq.s32.totalorder %s10, 0
    %p142 = por %p140, %p141
    %p143 = scmp.ne.s32.totalorder %s132, %s135
    %p144 = scmp.eq.s32.totalorder %s15, 1
    %p145 = por %p143, %p144
    %p146 = scmp.ne.s32.totalorder %s135, %s136
    %p147 = scmp.eq.s32.totalorder %s15, 0
    %p148 = por %p146, %p147
    %p149 = scmp.ne.s32.totalorder %s135, %s136
    %p150 = scmp.eq.s32.totalorder %s16, 1
    %p151 = por %p149, %p150
    %p153 = scmp.ne.s32.totalorder %s136, %s152
    %p154 = scmp.eq.s32.totalorder %s16, 0
    %p155 = por %p153, %p154
    %p156 = scmp.le.s32.totalorder 1, %s10
    %p157 = scmp.lt.s32.totalorder %s10, 3
    %p158 = pnand %p156, %p157
    %p159 = pneg %p158
    // Predicated region
    $region9: #{tpu_custom_call.1} parent=5 // pred_check
      _
    $region10: #{tpu_custom_call.1} parent=5 // pred_check_branch
      %161 = sbr.rel (%p158) target = $region12
    $region11: #{tpu_custom_call.1} parent=5 // pred_region
      %s162 = ssub.s32 %s10, 1
      // Predicated region
      $region13: #{tpu_custom_call.1} parent=11 // pred_check
        %p163 = pneg %p99
      $region14: #{tpu_custom_call.1} parent=11 // pred_check_branch
        %165 = sbr.rel (%p163) target = $region16
      $region15: #{tpu_custom_call.1} parent=11 // pred_region
        _
      $region16: #{tpu_custom_call.1} parent=11 // pred_fallthru
        _
      // Predicated region
      $region17: #{tpu_custom_call.1} parent=11 // pred_check
        %p166 = pneg %p120
      $region18: #{tpu_custom_call.1} parent=11 // pred_check_branch
        %168 = sbr.rel (%p166) target = $region20
      $region19: #{tpu_custom_call.1} parent=11 // pred_region
        _
      $region20: #{tpu_custom_call.1} parent=11 // pred_fallthru
        _
    $region12: #{tpu_custom_call.1} parent=5 // pred_fallthru
      _
    %p169 = scmp.lt.s32.totalorder %s10, 2
    // Predicated region
    $region21: #{tpu_custom_call.1} parent=5 // pred_check
      %p170 = pneg %p169
    $region22: #{tpu_custom_call.1} parent=5 // pred_check_branch
      %172 = sbr.rel (%p170) target = $region24
    $region23: #{tpu_custom_call.1} parent=5 // pred_region
      // Predicated region
      $region25: #{tpu_custom_call.1} parent=23 // pred_check
        %p173 = pneg %p44
      $region26: #{tpu_custom_call.1} parent=23 // pred_check_branch
        %175 = sbr.rel (%p173) target = $region28
      $region27: #{tpu_custom_call.1} parent=23 // pred_region
        %p176 = scmp.lt.s32.totalorder %s17, 1
        %s177 = scalar_select %p176, %s17, 1
        %p178 = scmp.lt.s32.totalorder %s18, 0
        %s179 = scalar_select %p178, %s18, 0
        %s180 = sadd.s32 %s179, %s177
        %s181 = smul.addr %s180, 4
        %s182 = scalar_lea.vmem %s0, %s181
      $region28: #{tpu_custom_call.1} parent=23 // pred_fallthru
        _
      // Predicated region
      $region29: #{tpu_custom_call.1} parent=23 // pred_check
        %p183 = pneg %p72
      $region30: #{tpu_custom_call.1} parent=23 // pred_check_branch
        %185 = sbr.rel (%p183) target = $region32
      $region31: #{tpu_custom_call.1} parent=23 // pred_region
        %p186 = scmp.lt.s32.totalorder %s17, 1
        %s187 = scalar_select %p186, %s17, 1
        %p188 = scmp.lt.s32.totalorder %s18, 0
        %s189 = scalar_select %p188, %s18, 0
        %s190 = sadd.s32 %s189, %s187
        %s191 = smul.addr %s190, 8
        %s192 = scalar_lea.vmem %s1, %s191
      $region32: #{tpu_custom_call.1} parent=23 // pred_fallthru
        _
    $region24: #{tpu_custom_call.1} parent=5 // pred_fallthru
      _
    %p193 = scmp.le.s32.totalorder 1, %s10
    %p194 = scmp.lt.s32.totalorder %s10, 3
    %p195 = pnand %p193, %p194
    %p196 = pneg %p195
    // Predicated region
    $region33: #{tpu_custom_call.1} parent=5 // pred_check
      _
    $region34: #{tpu_custom_call.1} parent=5 // pred_check_branch
      %198 = sbr.rel (%p195) target = $region36
    $region35: #{tpu_custom_call.1} parent=5 // pred_region
      %s199 = ssub.s32 %s10, 1
      %p200 = scmp.lt.s32.totalorder %s19, 1
      %s201 = scalar_select %p200, %s19, 1
      %p202 = scmp.lt.s32.totalorder %s20, 0
      %s203 = scalar_select %p202, %s20, 0
      %s204 = sadd.s32 %s203, %s201
      %s205 = smul.addr %s204, 4
      %s206 = scalar_lea.vmem %s0, %s205
      %p207 = pneg %p50
      %p208 = pneg %p47
      %p209 = scmp.lt.s32.totalorder %s19, 1
      %s210 = scalar_select %p209, %s19, 1
      %p211 = scmp.lt.s32.totalorder %s20, 0
      %s212 = scalar_select %p211, %s20, 0
      %s213 = sadd.s32 %s212, %s210
      %s214 = smul.addr %s213, 8
      %s215 = scalar_lea.vmem %s1, %s214
      %p216 = pneg %p78
      %p217 = pneg %p75
      %p218 = pneg %p99
      %p219 = pneg %p96
      %p220 = pneg %p120
      %p221 = pneg %p117
      %p222 = pneg %p148
      %p223 = pneg %p145
      %p224 = scmp.lt.s32.totalorder %s19, 1
      %s225 = scalar_select %p224, %s19, 1
      %p226 = scmp.lt.s32.totalorder %s20, 0
      %s227 = scalar_select %p226, %s20, 0
      %s228 = sadd.s32 %s227, %s225
      %s229 = smul.addr %s228, 8
      %s230 = scalar_lea.vmem %s4, %s229
      %p231 = scmp.lt.s32.totalorder %s19, 1
      %s232 = scalar_select %p231, %s19, 1
      %p233 = scmp.lt.s32.totalorder %s20, 0
      %s234 = scalar_select %p233, %s20, 0
      %s235 = sadd.s32 %s234, %s232
      %s236 = smul.addr %s235, 4
      %s237 = scalar_lea.vmem %s0, %s236
      %p238 = scmp.lt.s32.totalorder %s19, 1
      %s239 = scalar_select %p238, %s19, 1
      %p240 = scmp.lt.s32.totalorder %s20, 0
      %s241 = scalar_select %p240, %s20, 0
      %s242 = sadd.s32 %s241, %s239
      %s243 = smul.addr %s242, 8
      %s244 = scalar_lea.vmem %s1, %s243
      %p245 = scmp.lt.s32.totalorder %s19, 1
      %s246 = scalar_select %p245, %s19, 1
      %p247 = scmp.lt.s32.totalorder %s20, 0
      %s248 = scalar_select %p247, %s20, 0
      %s249 = sadd.s32 %s248, %s246
      %s250 = smul.addr %s249, 8
      %s251 = scalar_lea.vmem %s4, %s250
      %v252 = vld [vmem:[%s237] sm:$0xf]
      %253 = vrot.lane.b32.xlu0 %v252, 1
      %v254 = vpop.permute.xlu0 %253
      %255 = vrot.lane.b32.xlu0 %v252, 127
      %v256 = vpop.permute.xlu0 %255
      %v257 = vld [vmem:[%s2] sm:$0x3f]
      %s258 = scalar_lea.vmem %s2, 8
      %v259 = vld [vmem:[%s258] sm:$0x3f]
      %vm260 = vcmask 31744
      %v262 = vsel %vm260, %v259, 0
      %vm264 = vcmask 1043456
      %v266 = vsel %vm264, %v252, 0
      %268 = vmatprep.subr.mxu0 0.0
      %269 = vmatpush1.msra.mxu0 %v266
      %270 = vmatprep.subr.mxu0 0.0
      %271 = vmatpush1.msra.mxu0 0.0
      %272 = vmatprep.subr.mxu0 0.0
      %273 = vmatpush1.msra.mxu0 0.0
      %274 = vmatprep.subr.mxu0 0.0
      %275 = vmatpush1.msra.mxu0 0.0
      %276 = vmatprep.subr.mxu0 0.0
      %277 = vmatpush1.msra.mxu0 0.0
      %278 = vmatprep.subr.mxu0 0.0
      %279 = vmatpush1.msra.mxu0 0.0
      %280 = vmatprep.subr.mxu0 0.0
      %281 = vmatpush1.msra.mxu0 0.0
      %282 = vmatprep.subr.mxu0 0.0
      %283 = vmatpush1.msra.mxu0 0.0
      %284 = vmatprep.subr.mxu0 0.0
      %285 = vmatpush1.msra.mxu0 0.0
      %286 = vmatprep.subr.mxu0 0.0
      %287 = vmatpush1.msra.mxu0 0.0
      %288 = vmatprep.subr.mxu0 0.0
      %289 = vmatpush1.msra.mxu0 0.0
      %290 = vmatprep.subr.mxu0 0.0
      %291 = vmatpush1.msra.mxu0 0.0
      %292 = vmatprep.subr.mxu0 0.0
      %293 = vmatpush1.msra.mxu0 0.0
      %294 = vmatprep.subr.mxu0 0.0
      %295 = vmatpush1.msra.mxu0 0.0
      %296 = vmatprep.subr.mxu0 0.0
      %297 = vmatpush1.msra.mxu0 0.0
      %298 = vmatprep.subr.mxu0 0.0
      %299 = vmatpush1.msra.mxu0 0.0
      %300 = vmatprep.subr.mxu0 0.0
      %301 = vmatpush1.msra.mxu0 0.0
      %302 = vmatprep.subr.mxu0 0.0
      %303 = vmatpush1.msra.mxu0 0.0
      %304 = vmatprep.subr.mxu0 0.0
      %305 = vmatpush1.msra.mxu0 0.0
      %306 = vmatprep.subr.mxu0 0.0
      %307 = vmatpush1.msra.mxu0 0.0
      %308 = vmatprep.subr.mxu0 0.0
      %309 = vmatpush1.msra.mxu0 0.0
      %310 = vmatprep.subr.mxu0 0.0
      %311 = vmatpush1.msra.mxu0 0.0
      %312 = vmatprep.subr.mxu0 0.0
      %313 = vmatpush1.msra.mxu0 0.0
      %314 = vmatprep.subr.mxu0 0.0
      %315 = vmatpush1.msra.mxu0 0.0
      %316 = vmatprep.subr.mxu0 0.0
      %317 = vmatpush1.msra.mxu0 0.0
      %318 = vmatprep.subr.mxu0 0.0
      %319 = vmatpush1.msra.mxu0 0.0
      %320 = vmatprep.subr.mxu0 0.0
      %321 = vmatpush1.msra.mxu0 0.0
      %322 = vmatprep.subr.mxu0 0.0
      %323 = vmatpush1.msra.mxu0 0.0
      %324 = vmatprep.subr.mxu0 0.0
      %325 = vmatpush1.msra.mxu0 0.0
      %326 = vmatprep.subr.mxu0 0.0
      %327 = vmatpush1.msra.mxu0 0.0
      %328 = vmatprep.subr.mxu0 0.0
      %329 = vmatpush1.msra.mxu0 0.0
      %330 = vmatprep.subr.mxu0 0.0
      %331 = vmatpush1.msra.mxu0 0.0
      %332 = vmatprep.mubr.f32.mxu0 0.0
      %333 = vmatmul.mubr.f32.gmra.mrb[0].mxu0 %v262
      %v334 = vpop.f32.mrb[0].mxu0
      %v335 = vadd.f32 0.0, %v334
      %v336 = vpop.f32.mrb[0].mxu0
      %337 = vdwg.mxu0
      %v339 = vsel %vm260, %v257, 0
      %v342 = vsel %vm264, %v254, 0
      %344 = vmatprep.subr.mxu0 0.0
      %345 = vmatpush1.msra.mxu0 %v342
      %346 = vmatprep.subr.mxu0 0.0
      %347 = vmatpush1.msra.mxu0 0.0
      %348 = vmatprep.subr.mxu0 0.0
      %349 = vmatpush1.msra.mxu0 0.0
      %350 = vmatprep.subr.mxu0 0.0
      %351 = vmatpush1.msra.mxu0 0.0
      %352 = vmatprep.subr.mxu0 0.0
      %353 = vmatpush1.msra.mxu0 0.0
      %354 = vmatprep.subr.mxu0 0.0
      %355 = vmatpush1.msra.mxu0 0.0
      %356 = vmatprep.subr.mxu0 0.0
      %357 = vmatpush1.msra.mxu0 0.0
      %358 = vmatprep.subr.mxu0 0.0
      %359 = vmatpush1.msra.mxu0 0.0
      %360 = vmatprep.subr.mxu0 0.0
      %361 = vmatpush1.msra.mxu0 0.0
      %362 = vmatprep.subr.mxu0 0.0
      %363 = vmatpush1.msra.mxu0 0.0
      %364 = vmatprep.subr.mxu0 0.0
      %365 = vmatpush1.msra.mxu0 0.0
      %366 = vmatprep.subr.mxu0 0.0
      %367 = vmatpush1.msra.mxu0 0.0
      %368 = vmatprep.subr.mxu0 0.0
      %369 = vmatpush1.msra.mxu0 0.0
      %370 = vmatprep.subr.mxu0 0.0
      %371 = vmatpush1.msra.mxu0 0.0
      %372 = vmatprep.subr.mxu0 0.0
      %373 = vmatpush1.msra.mxu0 0.0
      %374 = vmatprep.subr.mxu0 0.0
      %375 = vmatpush1.msra.mxu0 0.0
      %376 = vmatprep.subr.mxu0 0.0
      %377 = vmatpush1.msra.mxu0 0.0
      %378 = vmatprep.subr.mxu0 0.0
      %379 = vmatpush1.msra.mxu0 0.0
      %380 = vmatprep.subr.mxu0 0.0
      %381 = vmatpush1.msra.mxu0 0.0
      %382 = vmatprep.subr.mxu0 0.0
      %383 = vmatpush1.msra.mxu0 0.0
      %384 = vmatprep.subr.mxu0 0.0
      %385 = vmatpush1.msra.mxu0 0.0
      %386 = vmatprep.subr.mxu0 0.0
      %387 = vmatpush1.msra.mxu0 0.0
      %388 = vmatprep.subr.mxu0 0.0
      %389 = vmatpush1.msra.mxu0 0.0
      %390 = vmatprep.subr.mxu0 0.0
      %391 = vmatpush1.msra.mxu0 0.0
      %392 = vmatprep.subr.mxu0 0.0
      %393 = vmatpush1.msra.mxu0 0.0
      %394 = vmatprep.subr.mxu0 0.0
      %395 = vmatpush1.msra.mxu0 0.0
      %396 = vmatprep.subr.mxu0 0.0
      %397 = vmatpush1.msra.mxu0 0.0
      %398 = vmatprep.subr.mxu0 0.0
      %399 = vmatpush1.msra.mxu0 0.0
      %400 = vmatprep.subr.mxu0 0.0
      %401 = vmatpush1.msra.mxu0 0.0
      %402 = vmatprep.subr.mxu0 0.0
      %403 = vmatpush1.msra.mxu0 0.0
      %404 = vmatprep.subr.mxu0 0.0
      %405 = vmatpush1.msra.mxu0 0.0
      %406 = vmatprep.subr.mxu0 0.0
      %407 = vmatpush1.msra.mxu0 0.0
      %408 = vmatprep.mubr.f32.mxu0 0.0
      %409 = vmatmul.mubr.f32.gmra.mrb[0].mxu0 %v339
      %v410 = vpop.f32.mrb[0].mxu0
      %v411 = vadd.f32 %v335, %v410
      %v412 = vpop.f32.mrb[0].mxu0
      %413 = vdwg.mxu0
      %s414 = scalar_lea.vmem %s2, 16
      %v415 = vld [vmem:[%s414] sm:$0x3f]
      %v417 = vsel %vm260, %v415, 0
      %v420 = vsel %vm264, %v256, 0
      %422 = vmatprep.subr.mxu0 0.0
      %423 = vmatpush1.msra.mxu0 %v420
      %424 = vmatprep.subr.mxu0 0.0
      %425 = vmatpush1.msra.mxu0 0.0
      %426 = vmatprep.subr.mxu0 0.0
      %427 = vmatpush1.msra.mxu0 0.0
      %428 = vmatprep.subr.mxu0 0.0
      %429 = vmatpush1.msra.mxu0 0.0
      %430 = vmatprep.subr.mxu0 0.0
      %431 = vmatpush1.msra.mxu0 0.0
      %432 = vmatprep.subr.mxu0 0.0
      %433 = vmatpush1.msra.mxu0 0.0
      %434 = vmatprep.subr.mxu0 0.0
      %435 = vmatpush1.msra.mxu0 0.0
      %436 = vmatprep.subr.mxu0 0.0
      %437 = vmatpush1.msra.mxu0 0.0
      %438 = vmatprep.subr.mxu0 0.0
      %439 = vmatpush1.msra.mxu0 0.0
      %440 = vmatprep.subr.mxu0 0.0
      %441 = vmatpush1.msra.mxu0 0.0
      %442 = vmatprep.subr.mxu0 0.0
      %443 = vmatpush1.msra.mxu0 0.0
      %444 = vmatprep.subr.mxu0 0.0
      %445 = vmatpush1.msra.mxu0 0.0
      %446 = vmatprep.subr.mxu0 0.0
      %447 = vmatpush1.msra.mxu0 0.0
      %448 = vmatprep.subr.mxu0 0.0
      %449 = vmatpush1.msra.mxu0 0.0
      %450 = vmatprep.subr.mxu0 0.0
      %451 = vmatpush1.msra.mxu0 0.0
      %452 = vmatprep.subr.mxu0 0.0
      %453 = vmatpush1.msra.mxu0 0.0
      %454 = vmatprep.subr.mxu0 0.0
      %455 = vmatpush1.msra.mxu0 0.0
      %456 = vmatprep.subr.mxu0 0.0
      %457 = vmatpush1.msra.mxu0 0.0
      %458 = vmatprep.subr.mxu0 0.0
      %459 = vmatpush1.msra.mxu0 0.0
      %460 = vmatprep.subr.mxu0 0.0
      %461 = vmatpush1.msra.mxu0 0.0
      %462 = vmatprep.subr.mxu0 0.0
      %463 = vmatpush1.msra.mxu0 0.0
      %464 = vmatprep.subr.mxu0 0.0
      %465 = vmatpush1.msra.mxu0 0.0
      %466 = vmatprep.subr.mxu0 0.0
      %467 = vmatpush1.msra.mxu0 0.0
      %468 = vmatprep.subr.mxu0 0.0
      %469 = vmatpush1.msra.mxu0 0.0
      %470 = vmatprep.subr.mxu0 0.0
      %471 = vmatpush1.msra.mxu0 0.0
      %472 = vmatprep.subr.mxu0 0.0
      %473 = vmatpush1.msra.mxu0 0.0
      %474 = vmatprep.subr.mxu0 0.0
      %475 = vmatpush1.msra.mxu0 0.0
      %476 = vmatprep.subr.mxu0 0.0
      %477 = vmatpush1.msra.mxu0 0.0
      %478 = vmatprep.subr.mxu0 0.0
      %479 = vmatpush1.msra.mxu0 0.0
      %480 = vmatprep.subr.mxu0 0.0
      %481 = vmatpush1.msra.mxu0 0.0
      %482 = vmatprep.subr.mxu0 0.0
      %483 = vmatpush1.msra.mxu0 0.0
      %484 = vmatprep.subr.mxu0 0.0
      %485 = vmatpush1.msra.mxu0 0.0
      %486 = vmatprep.mubr.f32.mxu0 0.0
      %487 = vmatmul.mubr.f32.gmra.mrb[0].mxu0 %v417
      %v488 = vpop.f32.mrb[0].mxu0
      %v489 = vadd.f32 0.0, %v488
      %v490 = vpop.f32.mrb[0].mxu0
      %491 = vdwg.mxu0
      %v492 = vadd.f32 %v411, %v489
      %v493 = vld [vmem:[%s3] sm:$0x3f]
      %495 = vset.pattern.permute.xlu0 0
      %496 = vperm.xlu0 %495, %v493
      %v497 = vpop.permute.xlu0 %496
      %v499 = vadd.f32 %v492, %v497
      %500 = vst [vmem:[%s251] sm:$0x3f] %v499
      %v501 = vld [vmem:[%s244] sm:$0x3f]
      %v502 = vadd.f32 %v499, %v501
      %vm503 = vcmask 5120
      %504 = vst.msk [vmem:[%s251] sm:$0x3f] %vm503, %v502
      %506 = vrot.lane.b32.xlu0 %v501, 126
      %v507 = vpop.permute.xlu0 %506
      %v509 = vadd.f32 %v499, %v507
      %vm510 = vcmask 1046520
      %511 = vst.msk [vmem:[%s251] sm:$0x3f] %vm510, %v509
      %p512 = scmp.lt.s32.totalorder %s19, 1
      %s513 = scalar_select %p512, %s19, 1
      %p514 = scmp.lt.s32.totalorder %s20, 0
      %s515 = scalar_select %p514, %s20, 0
      %s516 = sadd.s32 %s515, %s513
      %s517 = smul.addr %s516, 8
      %s518 = scalar_lea.vmem %s4, %s517
      // Predicated region
      $region37: #{tpu_custom_call.1} parent=35 // pred_check
        %p519 = pneg %p145
      $region38: #{tpu_custom_call.1} parent=35 // pred_check_branch
        %521 = sbr.rel (%p519) target = $region40
      $region39: #{tpu_custom_call.1} parent=35 // pred_region
        _
      $region40: #{tpu_custom_call.1} parent=35 // pred_fallthru
        _
    $region36: #{tpu_custom_call.1} parent=5 // pred_fallthru
      _
    %p522 = scmp.le.s32.totalorder 2, %s10
    // Predicated region
    $region41: #{tpu_custom_call.1} parent=5 // pred_check
      %p523 = pneg %p522
    $region42: #{tpu_custom_call.1} parent=5 // pred_check_branch
      %525 = sbr.rel (%p523) target = $region44
    $region43: #{tpu_custom_call.1} parent=5 // pred_region
      %s526 = ssub.s32 %s10, 2
      // Predicated region
      $region45: #{tpu_custom_call.1} parent=43 // pred_check
        %p527 = pneg %p151
      $region46: #{tpu_custom_call.1} parent=43 // pred_check_branch
        %529 = sbr.rel (%p527) target = $region48
      $region47: #{tpu_custom_call.1} parent=43 // pred_region
        %p530 = scmp.lt.s32.totalorder %s21, 1
        %s531 = scalar_select %p530, %s21, 1
        %p532 = scmp.lt.s32.totalorder %s22, 0
        %s533 = scalar_select %p532, %s22, 0
        %s534 = sadd.s32 %s533, %s531
        %s535 = smul.addr %s534, 8
        %s536 = scalar_lea.vmem %s4, %s535
      $region48: #{tpu_custom_call.1} parent=43 // pred_fallthru
        _
    $region44: #{tpu_custom_call.1} parent=5 // pred_fallthru
      _
  $region6: #{tpu_custom_call.1} parent=0 // loop_footer
    %s14 = sadd.s32 1, %s10
  $region7: #{tpu_custom_call.1} parent=0 // loop_footer_branch
    %9 = sbr.rel target = $region3
  $region8: #{tpu_custom_call.1} parent=0 // loop_exit
    _

</llo_original>
